<compile_context>
chip_gen: v7x
topology: tpu7x:2x2x1
jax: 0.10.0
libtpu: 0.0.40
codegen_flags: <defaults>
</compile_context>

<pallas_src>
import functools
import math

import jax
import jax.numpy as jnp
from jax.experimental import pallas as pl
from jax.experimental.pallas import tpu as pltpu


# ----------------------------------------------------------------------------
# M-tiled linear (x @ W + b) kernel — used for k_proj and wm_proj.
# ----------------------------------------------------------------------------
def _linear_kernel(x_ref, w_ref, b_ref, o_ref):
    acc = jnp.dot(x_ref[...].astype(jnp.bfloat16), w_ref[...],
                  preferred_element_type=jnp.float32) + b_ref[...]
    o_ref[...] = acc.astype(o_ref.dtype)


def linear(x, w, b, *, out_dtype=jnp.float32, tile_m=512):
    M, K = x.shape
    N = w.shape[1]
    if M % tile_m != 0:          # fallback: single full-M block
        tile_m = M
    return pl.pallas_call(
        _linear_kernel,
        out_shape=jax.ShapeDtypeStruct((M, N), out_dtype),
        grid=(M // tile_m,),
        in_specs=[
            pl.BlockSpec((tile_m, K), lambda i: (i, 0)),
            pl.BlockSpec((K, N), lambda i: (0, 0)),
            pl.BlockSpec((1, N), lambda i: (0, 0)),
        ],
        out_specs=pl.BlockSpec((tile_m, N), lambda i: (i, 0)),
        compiler_params=pltpu.CompilerParams(dimension_semantics=("parallel",)),
    )(x.astype(jnp.float32), w.astype(jnp.bfloat16),
      b.reshape(1, N).astype(jnp.float32))


# ----------------------------------------------------------------------------
# Fused query-side projections: q_proj -> (offset_proj, A_proj).
# The q_proj activation stays in VMEM (never written to HBM).
# ----------------------------------------------------------------------------
def _qproj_kernel(q_ref, wq_ref, bq_ref, woff_ref, boff_ref, wa_ref, ba_ref,
                  off_ref, a_ref):
    qp = jnp.dot(q_ref[...].astype(jnp.bfloat16), wq_ref[...],
                 preferred_element_type=jnp.float32) + bq_ref[...]
    qp16 = qp.astype(jnp.bfloat16)
    off_ref[...] = jnp.dot(qp16, woff_ref[...],
                           preferred_element_type=jnp.float32) + boff_ref[...]
    a_ref[...] = jnp.dot(qp16, wa_ref[...],
                         preferred_element_type=jnp.float32) + ba_ref[...]


def query_projections(q, params, *, tile_m=512):
    M, C = q.shape
    n_off = params["Woff"].shape[1]
    n_a = params["WA"].shape[1]
    if M % tile_m != 0:
        tile_m = M
    return pl.pallas_call(
        _qproj_kernel,
        out_shape=(jax.ShapeDtypeStruct((M, n_off), jnp.float32),
                   jax.ShapeDtypeStruct((M, n_a), jnp.float32)),
        grid=(M // tile_m,),
        in_specs=[
            pl.BlockSpec((tile_m, C), lambda i: (i, 0)),
            pl.BlockSpec((C, C), lambda i: (0, 0)),
            pl.BlockSpec((1, C), lambda i: (0, 0)),
            pl.BlockSpec((C, n_off), lambda i: (0, 0)),
            pl.BlockSpec((1, n_off), lambda i: (0, 0)),
            pl.BlockSpec((C, n_a), lambda i: (0, 0)),
            pl.BlockSpec((1, n_a), lambda i: (0, 0)),
        ],
        out_specs=(pl.BlockSpec((tile_m, n_off), lambda i: (i, 0)),
                   pl.BlockSpec((tile_m, n_a), lambda i: (i, 0))),
        compiler_params=pltpu.CompilerParams(dimension_semantics=("parallel",)),
    )(q.astype(jnp.float32),
      params["Wq"].astype(jnp.bfloat16), params["bq"].reshape(1, C),
      params["Woff"].astype(jnp.bfloat16), params["boff"].reshape(1, n_off),
      params["WA"].astype(jnp.bfloat16), params["bA"].reshape(1, n_a))


# ----------------------------------------------------------------------------
# Main deformable-attention kernel: one grid step per batch, all heads fused.
# ----------------------------------------------------------------------------
def _deform_attn_kernel(ref_ref, off_ref, a_ref, *rest,
                        dims, n_keys, n_scales, n_heads, dk, pn):
    feat_refs = rest[:n_scales]
    out_ref = rest[n_scales]
    hp = n_heads * pn
    C = n_heads * dk

    # softmax over the (scales*K) logits, vectorised over all heads*points
    logits = a_ref[0]                                    # (scales*K, hp)
    m = jnp.max(logits, axis=0, keepdims=True)
    e = jnp.exp(logits - m)
    A = e / jnp.sum(e, axis=0, keepdims=True)            # (scales*K, hp)

    ref_pt = ref_ref[0]                                  # (3, hp), values in [0,1]
    ref_x = ref_pt[0:1, :]
    ref_y = ref_pt[1:2, :]

    acc = jnp.zeros((hp, C), jnp.float32)

    for l in range(n_scales):
        Hd, Wd, Zd = dims[l]
        hwz = Hd * Wd * Zd
        WZ = Wd * Zd

        # restore_scale: x *= (W-1), y *= (H-1)  (z never used, as in torch)
        rx = ref_x * float(Wd - 1)
        ry = ref_y * float(Hd - 1)

        # voxel (row) index of the flattened (Hd, Wd, Zd) volume
        row = jax.lax.broadcasted_iota(jnp.int32, (hwz, hp), 0)

        S = jnp.zeros((hwz, hp), jnp.float32)            # weighted sampling matrix
        for kk in range(n_keys):
            off_lk = off_ref[0, l, kk]                   # (3, hp)
            px = rx + off_lk[0:1, :]
            py = ry + off_lk[1:2, :]

            # vgrid (vgrid_z intentionally reuses y — preserved torch behaviour)
            gx = 3.0 * px / float(max(Wd - 1, 1)) - 1.0
            gy = 3.0 * py / float(max(Hd - 1, 1)) - 1.0
            gz = 3.0 * py / float(max(Zd - 1, 1)) - 1.0

            # grid_sample(align_corners=False) un-normalisation.
            # Input volume (D_in, H_in, W_in) = (Hd, Wd, Zd): x->Zd, y->Wd, z->Hd.
            ix = ((gx + 1.0) * float(Zd) - 1.0) * 0.5
            iy = ((gy + 1.0) * float(Wd) - 1.0) * 0.5
            iz = ((gz + 1.0) * float(Hd) - 1.0) * 0.5

            x0 = jnp.floor(ix)
            y0 = jnp.floor(iy)
            z0 = jnp.floor(iz)
            fx = ix - x0
            fy = iy - y0
            fz = iz - z0

            # Per-corner validity (padding_mode='zeros') folded into the weights;
            # the softmax weight A is folded in as well (linear, exact).
            a_kk = A[l * n_keys + kk: l * n_keys + kk + 1, :]          # (1, hp)
            wx0 = jnp.where((x0 >= 0.0) & (x0 <= float(Zd - 1)), 1.0 - fx, 0.0)
            wx1 = jnp.where((x0 >= -1.0) & (x0 <= float(Zd - 2)), fx, 0.0)
            wy0 = jnp.where((y0 >= 0.0) & (y0 <= float(Wd - 1)), 1.0 - fy, 0.0)
            wy1 = jnp.where((y0 >= -1.0) & (y0 <= float(Wd - 2)), fy, 0.0)
            wz0 = jnp.where((z0 >= 0.0) & (z0 <= float(Hd - 1)),
                            (1.0 - fz) * a_kk, 0.0)
            wz1 = jnp.where((z0 >= -1.0) & (z0 <= float(Hd - 2)), fz * a_kk, 0.0)

            # Flat index of the (z0, y0, x0) corner (un-clipped; invalid corners
            # carry zero weight, so where they land is irrelevant).
            fb = (z0.astype(jnp.int32) * WZ
                  + y0.astype(jnp.int32) * Zd
                  + x0.astype(jnp.int32))                # (1, hp)
            d = row - fb                                 # (hwz, hp)

            # 8 corners as 4 adjacent (x0, x0+1) pairs sharing one distance map.
            for dz, wz in ((0, wz0), (WZ, wz1)):
                for dy, wy in ((0, wy0), (Zd, wy1)):
                    w_pair = wy * wz                     # (1, hp)
                    o = dz + dy
                    S = S + jnp.where(
                        d == o, w_pair * wx0,
                        jnp.where(d == o + 1, w_pair * wx1, 0.0))

        # One MXU matmul per scale covering all heads and all K samples.
        sampled = jnp.dot(S.T.astype(jnp.bfloat16), feat_refs[l][0],
                          preferred_element_type=jnp.float32)          # (hp, C)
        acc = acc + sampled

    # Assemble the lane-dense (PN, C) output: head i contributes rows
    # [i*PN, (i+1)*PN) and columns [i*dk, (i+1)*dk) of acc.
    col = jax.lax.broadcasted_iota(jnp.int32, (pn, C), 1)
    result = jnp.zeros((pn, C), jnp.float32)
    for head in range(n_heads):
        in_block = (col >= head * dk) & (col < (head + 1) * dk)
        result = result + jnp.where(in_block,
                                    acc[head * pn:(head + 1) * pn, :], 0.0)
    out_ref[0] = result


# ----------------------------------------------------------------------------
# Wrapper reproducing DeformableHeadAttention.forward
# ----------------------------------------------------------------------------
def deformable_head_attention(query, keys, ref_point, params, *, h=8, k=4, scales=1):
    assert h == 8
    B, PN, _, C = query.shape
    assert C % h == 0
    dk = C // h
    SK = scales * k
    HP = h * PN

    q = query.reshape(B * PN, C)
    rp = ref_point.reshape(B, PN, 3)

    # fused q_proj -> offset_proj / A_proj
    off_flat, a_flat = query_projections(q, params)

    # offsets -> (B, scales, k, 3, h*PN)   (point index last = lane-dense)
    off = off_flat.reshape(B, PN, h, scales, k, 3)
    off = jnp.transpose(off, (0, 3, 4, 5, 2, 1)).reshape(B, scales, k, 3, HP)

    # attention logits -> (B, scales*k, h*PN)
    a_log = a_flat.reshape(B, PN, h, SK)
    a_log = jnp.transpose(a_log, (0, 3, 2, 1)).reshape(B, SK, HP)

    # torch: reversed_ref_point.repeat(h, 1, 1) pairs sample n = b*h + head with
    # the reference points of batch (b*h + head) % B — reproduce that pairing.
    bh_batch = (jnp.arange(B)[:, None] * h + jnp.arange(h)[None, :]) % B   # (B, h)
    ref_g = rp[bh_batch]                                                   # (B, h, PN, 3)
    ref_g = jnp.transpose(ref_g, (0, 3, 1, 2)).reshape(B, 3, HP)

    feats, dims = [], []
    for l in range(scales):
        fm = keys[l]
        _, Hd, Wd, Zd, _ = fm.shape
        dims.append((Hd, Wd, Zd))
        kf = linear(fm.reshape(B * Hd * Wd * Zd, C), params["Wk"], params["bk"],
                    out_dtype=jnp.bfloat16)              # bf16 -> half the DMA
        feats.append(kf.reshape(B, Hd * Wd * Zd, C))

    kernel = functools.partial(
        _deform_attn_kernel, dims=tuple(dims), n_keys=k, n_scales=scales,
        n_heads=h, dk=dk, pn=PN)
    in_specs = [
        pl.BlockSpec((1, 3, HP), lambda b: (b, 0, 0)),
        pl.BlockSpec((1, scales, k, 3, HP), lambda b: (b, 0, 0, 0, 0)),
        pl.BlockSpec((1, SK, HP), lambda b: (b, 0, 0)),
    ] + [
        pl.BlockSpec((1, d[0] * d[1] * d[2], C), lambda b: (b, 0, 0)) for d in dims
    ]
    out = pl.pallas_call(
        kernel,
        out_shape=jax.ShapeDtypeStruct((B, PN, C), jnp.float32),
        grid=(B,),
        in_specs=in_specs,
        out_specs=pl.BlockSpec((1, PN, C), lambda b: (b, 0, 0)),
        compiler_params=pltpu.CompilerParams(dimension_semantics=("parallel",)),
    )(ref_g, off, a_log, *feats)                          # (B, PN, C), lane-dense

    out = linear(out.reshape(B * PN, C), params["Wwm"], params["bwm"])
    out = out.reshape(B, PN, 1, C)
    attns = {"attns": None, "offsets": None}              # need_attn=False
    return out, attns


# ----------------------------------------------------------------------------
# Deterministic parameter init (shapes from DeformableHeadAttention.__init__)
# ----------------------------------------------------------------------------
def init_params(key, d_model, h, k, scales):
    out_dims = {
        "Wq": d_model,
        "Wk": d_model,
        "Wwm": d_model,
        "Woff": 3 * h * k * scales,
        "WA": h * k * scales,
    }
    params = {}
    ks = jax.random.split(key, 2 * len(out_dims))
    bound = 1.0 / math.sqrt(d_model)
    for i, name in enumerate(sorted(out_dims)):
        n_out = out_dims[name]
        params[name] = jax.random.uniform(
            ks[2 * i], (d_model, n_out), jnp.float32, -bound, bound)
        params["b" + name[1:]] = jax.random.uniform(
            ks[2 * i + 1], (n_out,), jnp.float32, -bound, bound)
    return params


if __name__ == "__main__":
    B = 2
    d_model = 32
    h = 8
    k_keys = 2
    scales = 1
    vl = 4                  # voxel_length
    PN = vl ** 3            # last_point_num = 64
    Hd = Wd = Zd = 4

    root = jax.random.PRNGKey(0)
    kq, kr, kfeat, kp = jax.random.split(root, 4)
    query = jax.random.normal(kq, (B, PN, 1, d_model), jnp.float32)
    ref_point = jax.random.uniform(kr, (B, PN, 1, 3), jnp.float32)
    keys_list = [jax.random.normal(kfeat, (B, Hd, Wd, Zd, d_model), jnp.float32)]
    params = init_params(kp, d_model, h, k_keys, scales)

    out, attns = deformable_head_attention(
        query, keys_list, ref_point, params, h=h, k=k_keys, scales=scales)
    out = jax.block_until_ready(out)
    assert out.shape == (B, PN, 1, d_model)
    assert bool(jnp.all(jnp.isfinite(out)))
    print("KERNEL_OK")
</pallas_src>

<mosaic_0001>
module attributes {stable_mosaic.version = 11 : i64} {
  func.func @_qproj_kernel(%arg0: i32, %arg1: memref<128x32xf32, #tpu.memory_space<vmem>>, %arg2: memref<32x32xbf16, #tpu.memory_space<vmem>>, %arg3: memref<1x32xf32, #tpu.memory_space<vmem>>, %arg4: memref<32x48xbf16, #tpu.memory_space<vmem>>, %arg5: memref<1x48xf32, #tpu.memory_space<vmem>>, %arg6: memref<32x16xbf16, #tpu.memory_space<vmem>>, %arg7: memref<1x16xf32, #tpu.memory_space<vmem>>, %arg8: memref<128x48xf32, #tpu.memory_space<vmem>>, %arg9: memref<128x16xf32, #tpu.memory_space<vmem>>) attributes {dimension_semantics = [#tpu.dimension_semantics<parallel>], iteration_bounds = array<i64: 1>, scalar_prefetch = 0 : i64, scratch_operands = 0 : i64, tpu.core_type = #tpu.core_type<tc>, window_params = [{transform_indices = @transform_0, window_bounds = array<i64: 128, 32>}, {pipeline_mode = #tpu.pipeline_mode<synchronous>, transform_indices = @transform_1, window_bounds = array<i64: 32, 32>}, {pipeline_mode = #tpu.pipeline_mode<synchronous>, transform_indices = @transform_2, window_bounds = array<i64: 1, 32>}, {pipeline_mode = #tpu.pipeline_mode<synchronous>, transform_indices = @transform_3, window_bounds = array<i64: 32, 48>}, {pipeline_mode = #tpu.pipeline_mode<synchronous>, transform_indices = @transform_4, window_bounds = array<i64: 1, 48>}, {pipeline_mode = #tpu.pipeline_mode<synchronous>, transform_indices = @transform_5, window_bounds = array<i64: 32, 16>}, {pipeline_mode = #tpu.pipeline_mode<synchronous>, transform_indices = @transform_6, window_bounds = array<i64: 1, 16>}, {transform_indices = @transform_7, window_bounds = array<i64: 128, 48>}, {transform_indices = @transform_8, window_bounds = array<i64: 128, 16>}]} {
    %c0 = arith.constant 0 : index
    %c0_0 = arith.constant 0 : index
    %0 = vector.load %arg1[%c0, %c0_0] : memref<128x32xf32, #tpu.memory_space<vmem>>, vector<128x32xf32>
    %1 = arith.truncf %0 : vector<128x32xf32> to vector<128x32xbf16>
    %c0_1 = arith.constant 0 : index
    %c0_2 = arith.constant 0 : index
    %2 = vector.load %arg2[%c0_1, %c0_2] : memref<32x32xbf16, #tpu.memory_space<vmem>>, vector<32x32xbf16>
    %cst = arith.constant dense<0.000000e+00> : vector<128x32xf32>
    %3 = tpu.matmul %1, %2, %cst {dimension_numbers = #tpu.dot_dimension_numbers<[1], [0], [0], [1], [0, 0, 1, 1], [], []>} : vector<128x32xbf16>, vector<32x32xbf16>, vector<128x32xf32> -> vector<128x32xf32>
    %c0_3 = arith.constant 0 : index
    %c0_4 = arith.constant 0 : index
    %4 = vector.load %arg3[%c0_3, %c0_4] : memref<1x32xf32, #tpu.memory_space<vmem>>, vector<1x32xf32>
    %5 = vector.broadcast %4 : vector<1x32xf32> to vector<128x32xf32>
    %6 = arith.addf %3, %5 : vector<128x32xf32>
    %7 = arith.truncf %6 : vector<128x32xf32> to vector<128x32xbf16>
    %c0_5 = arith.constant 0 : index
    %c0_6 = arith.constant 0 : index
    %8 = vector.load %arg4[%c0_5, %c0_6] : memref<32x48xbf16, #tpu.memory_space<vmem>>, vector<32x48xbf16>
    %cst_7 = arith.constant dense<0.000000e+00> : vector<128x48xf32>
    %9 = tpu.matmul %7, %8, %cst_7 {dimension_numbers = #tpu.dot_dimension_numbers<[1], [0], [0], [1], [0, 0, 1, 1], [], []>} : vector<128x32xbf16>, vector<32x48xbf16>, vector<128x48xf32> -> vector<128x48xf32>
    %c0_8 = arith.constant 0 : index
    %c0_9 = arith.constant 0 : index
    %10 = vector.load %arg5[%c0_8, %c0_9] : memref<1x48xf32, #tpu.memory_space<vmem>>, vector<1x48xf32>
    %11 = vector.broadcast %10 : vector<1x48xf32> to vector<128x48xf32>
    %12 = arith.addf %9, %11 : vector<128x48xf32>
    %c0_10 = arith.constant 0 : index
    %c0_11 = arith.constant 0 : index
    %13 = vector.load %arg8[%c0_10, %c0_11] : memref<128x48xf32, #tpu.memory_space<vmem>>, vector<128x48xf32>
    tpu.vector_store %arg8[%c0_10, %c0_11], %12 {strides = array<i32>} : memref<128x48xf32, #tpu.memory_space<vmem>>, vector<128x48xf32>,
    %c0_12 = arith.constant 0 : index
    %c0_13 = arith.constant 0 : index
    %14 = vector.load %arg6[%c0_12, %c0_13] : memref<32x16xbf16, #tpu.memory_space<vmem>>, vector<32x16xbf16>
    %cst_14 = arith.constant dense<0.000000e+00> : vector<128x16xf32>
    %15 = tpu.matmul %7, %14, %cst_14 {dimension_numbers = #tpu.dot_dimension_numbers<[1], [0], [0], [1], [0, 0, 1, 1], [], []>} : vector<128x32xbf16>, vector<32x16xbf16>, vector<128x16xf32> -> vector<128x16xf32>
    %c0_15 = arith.constant 0 : index
    %c0_16 = arith.constant 0 : index
    %16 = vector.load %arg7[%c0_15, %c0_16] : memref<1x16xf32, #tpu.memory_space<vmem>>, vector<1x16xf32>
    %17 = vector.broadcast %16 : vector<1x16xf32> to vector<128x16xf32>
    %18 = arith.addf %15, %17 : vector<128x16xf32>
    %c0_17 = arith.constant 0 : index
    %c0_18 = arith.constant 0 : index
    %19 = vector.load %arg9[%c0_17, %c0_18] : memref<128x16xf32, #tpu.memory_space<vmem>>, vector<128x16xf32>
    tpu.vector_store %arg9[%c0_17, %c0_18], %18 {strides = array<i32>} : memref<128x16xf32, #tpu.memory_space<vmem>>, vector<128x16xf32>,
    return
  }
  func.func @transform_0(%arg0: i32) -> (i32, i32) {
    %c0_i32 = arith.constant 0 : i32
    %c0_i32_0 = arith.constant 0 : i32
    return %arg0, %c0_i32 : i32, i32
  }
  func.func @transform_1(%arg0: i32) -> (i32, i32) {
    %c0_i32 = arith.constant 0 : i32
    %c0_i32_0 = arith.constant 0 : i32
    %c0_i32_1 = arith.constant 0 : i32
    return %c0_i32, %c0_i32_0 : i32, i32
  }
  func.func @transform_2(%arg0: i32) -> (i32, i32) {
    %c0_i32 = arith.constant 0 : i32
    %c0_i32_0 = arith.constant 0 : i32
    %c0_i32_1 = arith.constant 0 : i32
    return %c0_i32, %c0_i32_0 : i32, i32
  }
  func.func @transform_3(%arg0: i32) -> (i32, i32) {
    %c0_i32 = arith.constant 0 : i32
    %c0_i32_0 = arith.constant 0 : i32
    %c0_i32_1 = arith.constant 0 : i32
    return %c0_i32, %c0_i32_0 : i32, i32
  }
  func.func @transform_4(%arg0: i32) -> (i32, i32) {
    %c0_i32 = arith.constant 0 : i32
    %c0_i32_0 = arith.constant 0 : i32
    %c0_i32_1 = arith.constant 0 : i32
    return %c0_i32, %c0_i32_0 : i32, i32
  }
  func.func @transform_5(%arg0: i32) -> (i32, i32) {
    %c0_i32 = arith.constant 0 : i32
    %c0_i32_0 = arith.constant 0 : i32
    %c0_i32_1 = arith.constant 0 : i32
    return %c0_i32, %c0_i32_0 : i32, i32
  }
  func.func @transform_6(%arg0: i32) -> (i32, i32) {
    %c0_i32 = arith.constant 0 : i32
    %c0_i32_0 = arith.constant 0 : i32
    %c0_i32_1 = arith.constant 0 : i32
    return %c0_i32, %c0_i32_0 : i32, i32
  }
  func.func @transform_7(%arg0: i32) -> (i32, i32) {
    %c0_i32 = arith.constant 0 : i32
    %c0_i32_0 = arith.constant 0 : i32
    return %arg0, %c0_i32 : i32, i32
  }
  func.func @transform_8(%arg0: i32) -> (i32, i32) {
    %c0_i32 = arith.constant 0 : i32
    %c0_i32_0 = arith.constant 0 : i32
    return %arg0, %c0_i32 : i32, i32
  }
}

</mosaic_0001>

<llo_original>
// kernel: tpu_custom_call.1
$region0: #{tpu_custom_call.1}
  #allocation0 [shape = 'u32[]', space=smem, size = 0x4, offset = 0x4, fixed_abs, tag = 'smem constant byte address 0x4 - core index']
  #allocation1 [shape = 'u32[144,128]{1,0:T(1,128)}', space=vmem, size = 0x12000, scoped, tag = 'internal scratch']
  %s0 = inlined_call_operand.vmem [shape: f32[128,32], index: 0, kind: input, shape index: {}]
  %s1 = inlined_call_operand.vmem [shape: bf16[32,32], index: 1, kind: input, shape index: {}]
  %s2 = inlined_call_operand.vmem [shape: f32[1,32], index: 2, kind: input, shape index: {}]
  %s3 = inlined_call_operand.vmem [shape: bf16[32,48], index: 3, kind: input, shape index: {}]
  %s4 = inlined_call_operand.vmem [shape: f32[1,48], index: 4, kind: input, shape index: {}]
  %s5 = inlined_call_operand.vmem [shape: bf16[32,16], index: 5, kind: input, shape index: {}]
  %s6 = inlined_call_operand.vmem [shape: f32[1,16], index: 6, kind: input, shape index: {}]
  %s7 = inlined_call_operand.vmem [shape: f32[128,48], index: 7, kind: output, shape index: {0}]
  %s8 = inlined_call_operand.vmem [shape: f32[128,16], index: 8, kind: output, shape index: {1}]
  %9 = xla_tuple %s7, %s8
  %s10 = sld [smem:[#allocation0]]
  $region46: #{tpu_custom_call.1} parent=0
    _
  %s12 = ssub.s32 1, %s10
  %s13 = scalar_select 0, %s12, %s10
  // Predicated region
  $region2: #{tpu_custom_call.1} parent=0 // pred_check
    _
  $region3: #{tpu_custom_call.1} parent=0 // pred_check_branch
    %15 = sbr.rel (0) target = $region5
  $region4: #{tpu_custom_call.1} parent=0 // pred_region
    _
  $region5: #{tpu_custom_call.1} parent=0 // pred_fallthru
    _
  // Predicated region
  $region6: #{tpu_custom_call.1} parent=0 // pred_check
    _
  $region7: #{tpu_custom_call.1} parent=0 // pred_check_branch
    %17 = sbr.rel (0) target = $region9
  $region8: #{tpu_custom_call.1} parent=0 // pred_region
    _
  $region9: #{tpu_custom_call.1} parent=0 // pred_fallthru
    _
  // Predicated region
  $region10: #{tpu_custom_call.1} parent=0 // pred_check
    _
  $region11: #{tpu_custom_call.1} parent=0 // pred_check_branch
    %19 = sbr.rel (0) target = $region13
  $region12: #{tpu_custom_call.1} parent=0 // pred_region
    _
  $region13: #{tpu_custom_call.1} parent=0 // pred_fallthru
    _
  // Predicated region
  $region14: #{tpu_custom_call.1} parent=0 // pred_check
    _
  $region15: #{tpu_custom_call.1} parent=0 // pred_check_branch
    %21 = sbr.rel (0) target = $region17
  $region16: #{tpu_custom_call.1} parent=0 // pred_region
    _
  $region17: #{tpu_custom_call.1} parent=0 // pred_fallthru
    _
  // Predicated region
  $region18: #{tpu_custom_call.1} parent=0 // pred_check
    _
  $region19: #{tpu_custom_call.1} parent=0 // pred_check_branch
    %23 = sbr.rel (0) target = $region21
  $region20: #{tpu_custom_call.1} parent=0 // pred_region
    _
  $region21: #{tpu_custom_call.1} parent=0 // pred_fallthru
    _
  // Predicated region
  $region22: #{tpu_custom_call.1} parent=0 // pred_check
    _
  $region23: #{tpu_custom_call.1} parent=0 // pred_check_branch
    %25 = sbr.rel (0) target = $region25
  $region24: #{tpu_custom_call.1} parent=0 // pred_region
    _
  $region25: #{tpu_custom_call.1} parent=0 // pred_fallthru
    _
  // Predicated region
  $region26: #{tpu_custom_call.1} parent=0 // pred_check
    _
  $region27: #{tpu_custom_call.1} parent=0 // pred_check_branch
    %27 = sbr.rel (0) target = $region29
  $region28: #{tpu_custom_call.1} parent=0 // pred_region
    _
  $region29: #{tpu_custom_call.1} parent=0 // pred_fallthru
    _
  %v29 = vld [vmem:[%s0] sm:$0xff]
  %v30 = vld [vmem:[%s0 + $0x8] sm:$0xff]
  %v31 = vld [vmem:[%s0 + $0x10] sm:$0xff]
  %v32 = vld [vmem:[%s0 + $0x18] sm:$0xff]
  %v33 = vld [vmem:[%s0 + $0x20] sm:$0xff]
  %v34 = vld [vmem:[%s0 + $0x28] sm:$0xff]
  %v35 = vld [vmem:[%s0 + $0x30] sm:$0xff]
  %v36 = vld [vmem:[%s0 + $0x38] sm:$0xff]
  %v37 = vld [vmem:[%s0 + $0x40] sm:$0xff]
  %v38 = vld [vmem:[%s0 + $0x48] sm:$0xff]
  %v39 = vld [vmem:[%s0 + $0x50] sm:$0xff]
  %v40 = vld [vmem:[%s0 + $0x58] sm:$0xff]
  %v41 = vld [vmem:[%s0 + $0x60] sm:$0xff]
  %v42 = vld [vmem:[%s0 + $0x68] sm:$0xff]
  %v43 = vld [vmem:[%s0 + $0x70] sm:$0xff]
  %v44 = vld [vmem:[%s0 + $0x78] sm:$0xff]
  %v45 = vpack.c.bf16 %v30, %v29
  %v46 = vpack.c.bf16 %v32, %v31
  %v47 = vpack.c.bf16 %v34, %v33
  %v48 = vpack.c.bf16 %v36, %v35
  %v49 = vpack.c.bf16 %v38, %v37
  %v50 = vpack.c.bf16 %v40, %v39
  %v51 = vpack.c.bf16 %v42, %v41
  %v52 = vpack.c.bf16 %v44, %v43
  %v53 = vld [vmem:[%s1] sm:$0xf]
  %v54 = vld [vmem:[%s1 + $0x4] sm:$0xf]
  %v55 = vld [vmem:[%s1 + $0x8] sm:$0xf]
  %v56 = vld [vmem:[%s1 + $0xc] sm:$0xf]
  %v57 = vld [vmem:[%s2] sm:$0x1]
  %v59 = vlaneseq
  %v60 = vshrl.u32 %v59, 7
  %v61 = vsub.s32 0, %v60
  %v62 = vrot.slane %v57, %v61
  %v68 = vunpack.c.l.b16 %v53
  %v69 = vunpack.c.l.b16 %v54
  %v70 = vunpack.c.l.b16 %v55
  %v71 = vunpack.c.l.b16 %v56
  %v72 = vpack.c.b16 %v69, %v68
  %v73 = vpack.c.b16 %v71, %v70
  %vm76 = vcmask 261120
  %v78 = vsel %vm76, %v45, 0
  %v81 = vsel %vm76, %v46, 0
  %v84 = vsel %vm76, %v47, 0
  %v87 = vsel %vm76, %v48, 0
  %v90 = vsel %vm76, %v49, 0
  %v93 = vsel %vm76, %v50, 0
  %v96 = vsel %vm76, %v51, 0
  %v99 = vsel %vm76, %v52, 0
  %101 = vmatprep.subr.bf16.mxu0 0
  %102 = vmatpush1.bf16.msra.mxu0 %v72
  %103 = vmatprep.subr.bf16.mxu0 0
  %104 = vmatpush1.bf16.msra.mxu0 %v73
  %105 = vmatprep.subr.bf16.mxu0 0
  %106 = vmatpush1.bf16.msra.mxu0 0
  %107 = vmatprep.subr.bf16.mxu0 0
  %108 = vmatpush1.bf16.msra.mxu0 0
  %109 = vmatprep.subr.bf16.mxu0 0
  %110 = vmatpush1.bf16.msra.mxu0 0
  %111 = vmatprep.subr.bf16.mxu0 0
  %112 = vmatpush1.bf16.msra.mxu0 0
  %113 = vmatprep.subr.bf16.mxu0 0
  %114 = vmatpush1.bf16.msra.mxu0 0
  %115 = vmatprep.subr.bf16.mxu0 0
  %116 = vmatpush1.bf16.msra.mxu0 0
  %117 = vmatprep.subr.bf16.mxu0 0
  %118 = vmatpush1.bf16.msra.mxu0 0
  %119 = vmatprep.subr.bf16.mxu0 0
  %120 = vmatpush1.bf16.msra.mxu0 0
  %121 = vmatprep.subr.bf16.mxu0 0
  %122 = vmatpush1.bf16.msra.mxu0 0
  %123 = vmatprep.subr.bf16.mxu0 0
  %124 = vmatpush1.bf16.msra.mxu0 0
  %125 = vmatprep.subr.bf16.mxu0 0
  %126 = vmatpush1.bf16.msra.mxu0 0
  %127 = vmatprep.subr.bf16.mxu0 0
  %128 = vmatpush1.bf16.msra.mxu0 0
  %129 = vmatprep.subr.bf16.mxu0 0
  %130 = vmatpush1.bf16.msra.mxu0 0
  %131 = vmatprep.subr.bf16.mxu0 0
  %132 = vmatpush1.bf16.msra.mxu0 0
  %133 = vmatprep.mubr.bf16.mxu0 0
  %134 = vmatmul.mubr.bf16.gmra.mrb[0].mxu0 %v78
  %v135 = vpop.f32.mrb[0].mxu0
  %v136 = vadd.f32 %v62, %v135
  %v137 = vpop.f32.mrb[0].mxu0
  %v138 = vpop.f32.mrb[0].mxu0
  %v139 = vadd.f32 %v62, %v138
  %v140 = vpop.f32.mrb[0].mxu0
  %141 = vmatprep.mubr.bf16.mxu0 0
  %142 = vmatmul.mubr.bf16.gmra.mrb[0].mxu0 %v81
  %v143 = vpop.f32.mrb[0].mxu0
  %v144 = vadd.f32 %v62, %v143
  %v145 = vpop.f32.mrb[0].mxu0
  %v146 = vpop.f32.mrb[0].mxu0
  %v147 = vadd.f32 %v62, %v146
  %v148 = vpop.f32.mrb[0].mxu0
  %149 = vmatprep.mubr.bf16.mxu0 0
  %150 = vmatmul.mubr.bf16.gmra.mrb[0].mxu0 %v84
  %v151 = vpop.f32.mrb[0].mxu0
  %v152 = vadd.f32 %v62, %v151
  %v153 = vpop.f32.mrb[0].mxu0
  %v154 = vpop.f32.mrb[0].mxu0
  %v155 = vadd.f32 %v62, %v154
  %v156 = vpop.f32.mrb[0].mxu0
  %157 = vmatprep.mubr.bf16.mxu0 0
  %158 = vmatmul.mubr.bf16.gmra.mrb[0].mxu0 %v87
  %v159 = vpop.f32.mrb[0].mxu0
  %v160 = vadd.f32 %v62, %v159
  %v161 = vpop.f32.mrb[0].mxu0
  %v162 = vpop.f32.mrb[0].mxu0
  %v163 = vadd.f32 %v62, %v162
  %v164 = vpop.f32.mrb[0].mxu0
  %165 = vmatprep.mubr.bf16.mxu0 0
  %166 = vmatmul.mubr.bf16.gmra.mrb[0].mxu0 %v90
  %v167 = vpop.f32.mrb[0].mxu0
  %v168 = vadd.f32 %v62, %v167
  %v169 = vpop.f32.mrb[0].mxu0
  %v170 = vpop.f32.mrb[0].mxu0
  %v171 = vadd.f32 %v62, %v170
  %v172 = vpop.f32.mrb[0].mxu0
  %173 = vmatprep.mubr.bf16.mxu0 0
  %174 = vmatmul.mubr.bf16.gmra.mrb[0].mxu0 %v93
  %v175 = vpop.f32.mrb[0].mxu0
  %v176 = vadd.f32 %v62, %v175
  %v177 = vpop.f32.mrb[0].mxu0
  %v178 = vpop.f32.mrb[0].mxu0
  %v179 = vadd.f32 %v62, %v178
  %v180 = vpop.f32.mrb[0].mxu0
  %181 = vmatprep.mubr.bf16.mxu0 0
  %182 = vmatmul.mubr.bf16.gmra.mrb[0].mxu0 %v96
  %v183 = vpop.f32.mrb[0].mxu0
  %v184 = vadd.f32 %v62, %v183
  %v185 = vpop.f32.mrb[0].mxu0
  %v186 = vpop.f32.mrb[0].mxu0
  %v187 = vadd.f32 %v62, %v186
  %v188 = vpop.f32.mrb[0].mxu0
  %189 = vmatprep.mubr.bf16.mxu0 0
  %190 = vmatmul.mubr.bf16.gmra.mrb[0].mxu0 %v99
  %v191 = vpop.f32.mrb[0].mxu0
  %v192 = vadd.f32 %v62, %v191
  %v193 = vpop.f32.mrb[0].mxu0
  %v194 = vpop.f32.mrb[0].mxu0
  %v195 = vadd.f32 %v62, %v194
  %v196 = vpop.f32.mrb[0].mxu0
  %197 = vdwg.mxu0
  %v198 = vpack.c.bf16 %v139, %v136
  %v199 = vpack.c.bf16 %v147, %v144
  %v200 = vpack.c.bf16 %v155, %v152
  %v201 = vpack.c.bf16 %v163, %v160
  %v202 = vpack.c.bf16 %v171, %v168
  %v203 = vpack.c.bf16 %v179, %v176
  %v204 = vpack.c.bf16 %v187, %v184
  %v205 = vpack.c.bf16 %v195, %v192
  %v206 = vld [vmem:[%s3] sm:$0xf]
  %v207 = vld [vmem:[%s3 + $0x4] sm:$0xf]
  %v208 = vld [vmem:[%s3 + $0x8] sm:$0xf]
  %v209 = vld [vmem:[%s3 + $0xc] sm:$0xf]
  %v210 = vld [vmem:[%s4] sm:$0x1]
  %v212 = vlaneseq
  %v213 = vshrl.u32 %v212, 7
  %v214 = vsub.s32 0, %v213
  %v215 = vrot.slane %v210, %v214
  %v221 = vunpack.c.l.b16 %v206
  %v222 = vunpack.c.l.b16 %v207
  %v223 = vunpack.c.l.b16 %v208
  %v224 = vunpack.c.l.b16 %v209
  %v225 = vpack.c.b16 %v222, %v221
  %v226 = vpack.c.b16 %v224, %v223
  %v230 = vsel %vm76, %v198, 0
  %v233 = vsel %vm76, %v199, 0
  %v236 = vsel %vm76, %v200, 0
  %v239 = vsel %vm76, %v201, 0
  %v242 = vsel %vm76, %v202, 0
  %v245 = vsel %vm76, %v203, 0
  %v248 = vsel %vm76, %v204, 0
  %v251 = vsel %vm76, %v205, 0
  %253 = vmatprep.subr.bf16.mxu0 0
  %254 = vmatpush1.bf16.msra.mxu0 %v225
  %255 = vmatprep.subr.bf16.mxu0 0
  %256 = vmatpush1.bf16.msra.mxu0 %v226
  %257 = vmatprep.subr.bf16.mxu0 0
  %258 = vmatpush1.bf16.msra.mxu0 0
  %259 = vmatprep.subr.bf16.mxu0 0
  %260 = vmatpush1.bf16.msra.mxu0 0
  %261 = vmatprep.subr.bf16.mxu0 0
  %262 = vmatpush1.bf16.msra.mxu0 0
  %263 = vmatprep.subr.bf16.mxu0 0
  %264 = vmatpush1.bf16.msra.mxu0 0
  %265 = vmatprep.subr.bf16.mxu0 0
  %266 = vmatpush1.bf16.msra.mxu0 0
  %267 = vmatprep.subr.bf16.mxu0 0
  %268 = vmatpush1.bf16.msra.mxu0 0
  %269 = vmatprep.subr.bf16.mxu0 0
  %270 = vmatpush1.bf16.msra.mxu0 0
  %271 = vmatprep.subr.bf16.mxu0 0
  %272 = vmatpush1.bf16.msra.mxu0 0
  %273 = vmatprep.subr.bf16.mxu0 0
  %274 = vmatpush1.bf16.msra.mxu0 0
  %275 = vmatprep.subr.bf16.mxu0 0
  %276 = vmatpush1.bf16.msra.mxu0 0
  %277 = vmatprep.subr.bf16.mxu0 0
  %278 = vmatpush1.bf16.msra.mxu0 0
  %279 = vmatprep.subr.bf16.mxu0 0
  %280 = vmatpush1.bf16.msra.mxu0 0
  %281 = vmatprep.subr.bf16.mxu0 0
  %282 = vmatpush1.bf16.msra.mxu0 0
  %283 = vmatprep.subr.bf16.mxu0 0
  %284 = vmatpush1.bf16.msra.mxu0 0
  %285 = vmatprep.mubr.bf16.mxu0 0
  %286 = vmatmul.mubr.bf16.gmra.mrb[0].mxu0 %v230
  %v287 = vpop.f32.mrb[0].mxu0
  %v288 = vadd.f32 %v215, %v287
  %v289 = vpop.f32.mrb[0].mxu0
  %v290 = vpop.f32.mrb[0].mxu0
  %v291 = vadd.f32 %v215, %v290
  %v292 = vpop.f32.mrb[0].mxu0
  %293 = vmatprep.mubr.bf16.mxu0 0
  %294 = vmatmul.mubr.bf16.gmra.mrb[0].mxu0 %v233
  %v295 = vpop.f32.mrb[0].mxu0
  %v296 = vadd.f32 %v215, %v295
  %v297 = vpop.f32.mrb[0].mxu0
  %v298 = vpop.f32.mrb[0].mxu0
  %v299 = vadd.f32 %v215, %v298
  %v300 = vpop.f32.mrb[0].mxu0
  %301 = vmatprep.mubr.bf16.mxu0 0
  %302 = vmatmul.mubr.bf16.gmra.mrb[0].mxu0 %v236
  %v303 = vpop.f32.mrb[0].mxu0
  %v304 = vadd.f32 %v215, %v303
  %v305 = vpop.f32.mrb[0].mxu0
  %v306 = vpop.f32.mrb[0].mxu0
  %v307 = vadd.f32 %v215, %v306
  %v308 = vpop.f32.mrb[0].mxu0
  %309 = vmatprep.mubr.bf16.mxu0 0
  %310 = vmatmul.mubr.bf16.gmra.mrb[0].mxu0 %v239
  %v311 = vpop.f32.mrb[0].mxu0
  %v312 = vadd.f32 %v215, %v311
  %v313 = vpop.f32.mrb[0].mxu0
  %v314 = vpop.f32.mrb[0].mxu0
  %v315 = vadd.f32 %v215, %v314
  %v316 = vpop.f32.mrb[0].mxu0
  %317 = vmatprep.mubr.bf16.mxu0 0
  %318 = vmatmul.mubr.bf16.gmra.mrb[0].mxu0 %v242
  %v319 = vpop.f32.mrb[0].mxu0
  %v320 = vadd.f32 %v215, %v319
  %v321 = vpop.f32.mrb[0].mxu0
  %v322 = vpop.f32.mrb[0].mxu0
  %v323 = vadd.f32 %v215, %v322
  %v324 = vpop.f32.mrb[0].mxu0
  %325 = vmatprep.mubr.bf16.mxu0 0
  %326 = vmatmul.mubr.bf16.gmra.mrb[0].mxu0 %v245
  %v327 = vpop.f32.mrb[0].mxu0
  %v328 = vadd.f32 %v215, %v327
  %v329 = vpop.f32.mrb[0].mxu0
  %v330 = vpop.f32.mrb[0].mxu0
  %v331 = vadd.f32 %v215, %v330
  %v332 = vpop.f32.mrb[0].mxu0
  %333 = vmatprep.mubr.bf16.mxu0 0
  %334 = vmatmul.mubr.bf16.gmra.mrb[0].mxu0 %v248
  %v335 = vpop.f32.mrb[0].mxu0
  %v336 = vadd.f32 %v215, %v335
  %v337 = vpop.f32.mrb[0].mxu0
  %v338 = vpop.f32.mrb[0].mxu0
  %v339 = vadd.f32 %v215, %v338
  %v340 = vpop.f32.mrb[0].mxu0
  %341 = vmatprep.mubr.bf16.mxu0 0
  %342 = vmatmul.mubr.bf16.gmra.mrb[0].mxu0 %v251
  %v343 = vpop.f32.mrb[0].mxu0
  %v344 = vadd.f32 %v215, %v343
  %v345 = vpop.f32.mrb[0].mxu0
  %v346 = vpop.f32.mrb[0].mxu0
  %v347 = vadd.f32 %v215, %v346
  %v348 = vpop.f32.mrb[0].mxu0
  %349 = vdwg.mxu0
  %vm350 = vcmask 392192
  %351 = vst.msk [vmem:[%s7] sm:$0xff] %vm350, %v288
  %352 = vst.msk [vmem:[%s7 + $0x8] sm:$0xff] %vm350, %v291
  %353 = vst.msk [vmem:[%s7 + $0x10] sm:$0xff] %vm350, %v296
  %354 = vst.msk [vmem:[%s7 + $0x18] sm:$0xff] %vm350, %v299
  %355 = vst.msk [vmem:[%s7 + $0x20] sm:$0xff] %vm350, %v304
  %356 = vst.msk [vmem:[%s7 + $0x28] sm:$0xff] %vm350, %v307
  %357 = vst.msk [vmem:[%s7 + $0x30] sm:$0xff] %vm350, %v312
  %358 = vst.msk [vmem:[%s7 + $0x38] sm:$0xff] %vm350, %v315
  %359 = vst.msk [vmem:[%s7 + $0x40] sm:$0xff] %vm350, %v320
  %360 = vst.msk [vmem:[%s7 + $0x48] sm:$0xff] %vm350, %v323
  %361 = vst.msk [vmem:[%s7 + $0x50] sm:$0xff] %vm350, %v328
  %362 = vst.msk [vmem:[%s7 + $0x58] sm:$0xff] %vm350, %v331
  %363 = vst.msk [vmem:[%s7 + $0x60] sm:$0xff] %vm350, %v336
  %364 = vst.msk [vmem:[%s7 + $0x68] sm:$0xff] %vm350, %v339
  %365 = vst.msk [vmem:[%s7 + $0x70] sm:$0xff] %vm350, %v344
  %366 = vst.msk [vmem:[%s7 + $0x78] sm:$0xff] %vm350, %v347
  %v367 = vld [vmem:[%s5] sm:$0xf]
  %v368 = vld [vmem:[%s5 + $0x4] sm:$0xf]
  %v369 = vld [vmem:[%s5 + $0x8] sm:$0xf]
  %v370 = vld [vmem:[%s5 + $0xc] sm:$0xf]
  %v371 = vld [vmem:[%s6] sm:$0x1]
  %v373 = vlaneseq
  %v374 = vshrl.u32 %v373, 7
  %v375 = vsub.s32 0, %v374
  %v376 = vrot.slane %v371, %v375
  %v382 = vunpack.c.l.b16 %v367
  %v383 = vunpack.c.l.b16 %v368
  %v384 = vunpack.c.l.b16 %v369
  %v385 = vunpack.c.l.b16 %v370
  %v386 = vpack.c.b16 %v383, %v382
  %v387 = vpack.c.b16 %v385, %v384
  %390 = vmatprep.subr.bf16.mxu0 0
  %391 = vmatpush1.bf16.msra.mxu0 %v386
  %392 = vmatprep.subr.bf16.mxu0 0
  %393 = vmatpush1.bf16.msra.mxu0 %v387
  %394 = vmatprep.subr.bf16.mxu0 0
  %395 = vmatpush1.bf16.msra.mxu0 0
  %396 = vmatprep.subr.bf16.mxu0 0
  %397 = vmatpush1.bf16.msra.mxu0 0
  %398 = vmatprep.subr.bf16.mxu0 0
  %399 = vmatpush1.bf16.msra.mxu0 0
  %400 = vmatprep.subr.bf16.mxu0 0
  %401 = vmatpush1.bf16.msra.mxu0 0
  %402 = vmatprep.subr.bf16.mxu0 0
  %403 = vmatpush1.bf16.msra.mxu0 0
  %404 = vmatprep.subr.bf16.mxu0 0
  %405 = vmatpush1.bf16.msra.mxu0 0
  %406 = vmatprep.subr.bf16.mxu0 0
  %407 = vmatpush1.bf16.msra.mxu0 0
  %408 = vmatprep.subr.bf16.mxu0 0
  %409 = vmatpush1.bf16.msra.mxu0 0
  %410 = vmatprep.subr.bf16.mxu0 0
  %411 = vmatpush1.bf16.msra.mxu0 0
  %412 = vmatprep.subr.bf16.mxu0 0
  %413 = vmatpush1.bf16.msra.mxu0 0
  %414 = vmatprep.subr.bf16.mxu0 0
  %415 = vmatpush1.bf16.msra.mxu0 0
  %416 = vmatprep.subr.bf16.mxu0 0
  %417 = vmatpush1.bf16.msra.mxu0 0
  %418 = vmatprep.subr.bf16.mxu0 0
  %419 = vmatpush1.bf16.msra.mxu0 0
  %420 = vmatprep.subr.bf16.mxu0 0
  %421 = vmatpush1.bf16.msra.mxu0 0
  %422 = vmatprep.mubr.bf16.mxu0 0
  %423 = vmatmul.mubr.bf16.gmra.mrb[0].mxu0 %v230
  %v424 = vpop.f32.mrb[0].mxu0
  %v425 = vadd.f32 %v376, %v424
  %v426 = vpop.f32.mrb[0].mxu0
  %v427 = vpop.f32.mrb[0].mxu0
  %v428 = vadd.f32 %v376, %v427
  %v429 = vpop.f32.mrb[0].mxu0
  %430 = vmatprep.mubr.bf16.mxu0 0
  %431 = vmatmul.mubr.bf16.gmra.mrb[0].mxu0 %v233
  %v432 = vpop.f32.mrb[0].mxu0
  %v433 = vadd.f32 %v376, %v432
  %v434 = vpop.f32.mrb[0].mxu0
  %v435 = vpop.f32.mrb[0].mxu0
  %v436 = vadd.f32 %v376, %v435
  %v437 = vpop.f32.mrb[0].mxu0
  %438 = vmatprep.mubr.bf16.mxu0 0
  %439 = vmatmul.mubr.bf16.gmra.mrb[0].mxu0 %v236
  %v440 = vpop.f32.mrb[0].mxu0
  %v441 = vadd.f32 %v376, %v440
  %v442 = vpop.f32.mrb[0].mxu0
  %v443 = vpop.f32.mrb[0].mxu0
  %v444 = vadd.f32 %v376, %v443
  %v445 = vpop.f32.mrb[0].mxu0
  %446 = vmatprep.mubr.bf16.mxu0 0
  %447 = vmatmul.mubr.bf16.gmra.mrb[0].mxu0 %v239
  %v448 = vpop.f32.mrb[0].mxu0
  %v449 = vadd.f32 %v376, %v448
  %v450 = vpop.f32.mrb[0].mxu0
  %v451 = vpop.f32.mrb[0].mxu0
  %v452 = vadd.f32 %v376, %v451
  %v453 = vpop.f32.mrb[0].mxu0
  %454 = vmatprep.mubr.bf16.mxu0 0
  %455 = vmatmul.mubr.bf16.gmra.mrb[0].mxu0 %v242
  %v456 = vpop.f32.mrb[0].mxu0
  %v457 = vadd.f32 %v376, %v456
  %v458 = vpop.f32.mrb[0].mxu0
  %v459 = vpop.f32.mrb[0].mxu0
  %v460 = vadd.f32 %v376, %v459
  %v461 = vpop.f32.mrb[0].mxu0
  %462 = vmatprep.mubr.bf16.mxu0 0
  %463 = vmatmul.mubr.bf16.gmra.mrb[0].mxu0 %v245
  %v464 = vpop.f32.mrb[0].mxu0
  %v465 = vadd.f32 %v376, %v464
  %v466 = vpop.f32.mrb[0].mxu0
  %v467 = vpop.f32.mrb[0].mxu0
  %v468 = vadd.f32 %v376, %v467
  %v469 = vpop.f32.mrb[0].mxu0
  %470 = vmatprep.mubr.bf16.mxu0 0
  %471 = vmatmul.mubr.bf16.gmra.mrb[0].mxu0 %v248
  %v472 = vpop.f32.mrb[0].mxu0
  %v473 = vadd.f32 %v376, %v472
  %v474 = vpop.f32.mrb[0].mxu0
  %v475 = vpop.f32.mrb[0].mxu0
  %v476 = vadd.f32 %v376, %v475
  %v477 = vpop.f32.mrb[0].mxu0
  %478 = vmatprep.mubr.bf16.mxu0 0
  %479 = vmatmul.mubr.bf16.gmra.mrb[0].mxu0 %v251
  %v480 = vpop.f32.mrb[0].mxu0
  %v481 = vadd.f32 %v376, %v480
  %v482 = vpop.f32.mrb[0].mxu0
  %v483 = vpop.f32.mrb[0].mxu0
  %v484 = vadd.f32 %v376, %v483
  %v485 = vpop.f32.mrb[0].mxu0
  %486 = vdwg.mxu0
  %vm487 = vcmask 130048
  %488 = vst.msk [vmem:[%s8] sm:$0xff] %vm487, %v425
  %489 = vst.msk [vmem:[%s8 + $0x8] sm:$0xff] %vm487, %v428
  %490 = vst.msk [vmem:[%s8 + $0x10] sm:$0xff] %vm487, %v433
  %491 = vst.msk [vmem:[%s8 + $0x18] sm:$0xff] %vm487, %v436
  %492 = vst.msk [vmem:[%s8 + $0x20] sm:$0xff] %vm487, %v441
  %493 = vst.msk [vmem:[%s8 + $0x28] sm:$0xff] %vm487, %v444
  %494 = vst.msk [vmem:[%s8 + $0x30] sm:$0xff] %vm487, %v449
  %495 = vst.msk [vmem:[%s8 + $0x38] sm:$0xff] %vm487, %v452
  %496 = vst.msk [vmem:[%s8 + $0x40] sm:$0xff] %vm487, %v457
  %497 = vst.msk [vmem:[%s8 + $0x48] sm:$0xff] %vm487, %v460
  %498 = vst.msk [vmem:[%s8 + $0x50] sm:$0xff] %vm487, %v465
  %499 = vst.msk [vmem:[%s8 + $0x58] sm:$0xff] %vm487, %v468
  %500 = vst.msk [vmem:[%s8 + $0x60] sm:$0xff] %vm487, %v473
  %501 = vst.msk [vmem:[%s8 + $0x68] sm:$0xff] %vm487, %v476
  %502 = vst.msk [vmem:[%s8 + $0x70] sm:$0xff] %vm487, %v481
  %503 = vst.msk [vmem:[%s8 + $0x78] sm:$0xff] %vm487, %v484
  // Predicated region
  $region30: #{tpu_custom_call.1} parent=0 // pred_check
    _
  $region31: #{tpu_custom_call.1} parent=0 // pred_check_branch
    %505 = sbr.rel (0) target = $region33
  $region32: #{tpu_custom_call.1} parent=0 // pred_region
    _
  $region33: #{tpu_custom_call.1} parent=0 // pred_fallthru
    _
  // Predicated region
  $region34: #{tpu_custom_call.1} parent=0 // pred_check
    _
  $region35: #{tpu_custom_call.1} parent=0 // pred_check_branch
    %507 = sbr.rel (0) target = $region37
  $region36: #{tpu_custom_call.1} parent=0 // pred_region
    _
  $region37: #{tpu_custom_call.1} parent=0 // pred_fallthru
    _
  // Predicated region
  $region38: #{tpu_custom_call.1} parent=0 // pred_check
    _
  $region39: #{tpu_custom_call.1} parent=0 // pred_check_branch
    %509 = sbr.rel (0) target = $region41
  $region40: #{tpu_custom_call.1} parent=0 // pred_region
    _
  $region41: #{tpu_custom_call.1} parent=0 // pred_fallthru
    _
  // Predicated region
  $region42: #{tpu_custom_call.1} parent=0 // pred_check
    _
  $region43: #{tpu_custom_call.1} parent=0 // pred_check_branch
    %511 = sbr.rel (0) target = $region45
  $region44: #{tpu_custom_call.1} parent=0 // pred_region
    _
  $region45: #{tpu_custom_call.1} parent=0 // pred_fallthru
    _

</llo_original>
